<compile_context>
chip_gen: v7x
topology: tpu7x:2x2x1
jax: 0.10.0
libtpu: 0.0.40
codegen_flags: <defaults>
</compile_context>

<pallas_src>
import jax
import jax.numpy as jnp
from jax.experimental import pallas as pl
from jax.experimental.pallas import tpu as pltpu


def _make_fused_loss_kernel(n_valid, b_pad, inv_count):
    """Kernel factory; n_valid/b_pad/inv_count are static *Python* scalars so they
    become literals in the kernel (no captured jax constants)."""
    n_valid = int(n_valid)
    b_pad = int(b_pad)
    inv_count = float(inv_count)

    def kernel(x_ref, w1_ref, b1_ref, w2_ref, b2_ref, clip_ref, loss_ref, acc_ref):
        j = pl.program_id(0)

        # ---- init accumulator on the first column tile ----
        @pl.when(j == 0)
        def _init():
            acc_ref[...] = jnp.zeros_like(acc_ref)

        # ---- encoder layer 1 (column block): relu(x @ w1[:, blk] + b1[blk]) ----
        h = jnp.dot(x_ref[...], w1_ref[...], preferred_element_type=jnp.float32)
        h = h + b1_ref[...].astype(jnp.float32)        # bias broadcast over batch
        h = jnp.maximum(h, 0.0).astype(x_ref.dtype)    # back to half precision (as torch)

        # ---- encoder layer 2 partial: acc += h_blk @ w2[blk, :] ----
        acc_ref[...] += jnp.dot(h, w2_ref[...], preferred_element_type=jnp.float32)

        # ---- finalize: bias, MSE vs clip embeddings (mask padded batch rows) ----
        @pl.when(j == pl.num_programs(0) - 1)
        def _finalize():
            e = acc_ref[...] + b2_ref[...].astype(jnp.float32)
            diff = e - clip_ref[...].astype(jnp.float32)
            if n_valid < b_pad:
                row = jax.lax.broadcasted_iota(jnp.int32, diff.shape, 0)
                diff = jnp.where(row < n_valid, diff, 0.0)
            loss_ref[0] = jnp.sum(diff * diff) * inv_count

    return kernel


def dummy_model_loss(frames, clip_embeddings, params):
    """Equivalent of DummyModel.forward(frames, clip_embeddings)."""
    w1, b1, w2, b2 = params  # w1: (D, D) in->out, b1: (1, D), w2: (D, E), b2: (1, E)
    B = frames.shape[0]
    x = frames.reshape(B, -1)                 # glue reshape stays in plain JAX
    D = x.shape[1]
    E = clip_embeddings.shape[1]

    # Pad batch to a sublane-friendly multiple of 8 (cheap; masked out of the loss).
    B_pad = max(8, ((B + 7) // 8) * 8)
    if B_pad != B:
        x = jnp.pad(x, ((0, B_pad - B), (0, 0)))
        clip = jnp.pad(clip_embeddings, ((0, B_pad - B), (0, 0)))
    else:
        clip = clip_embeddings

    # Hidden-column tile width: largest lane-dense width that divides D.
    # (256+ preferred on v6e/v7x MXU; fall back to a single block if D is not 128-aligned.)
    TN = D
    for cand in (512, 256, 128):
        if D % cand == 0:
            TN = cand
            break
    n_tiles = D // TN

    itemsize = jnp.dtype(x.dtype).itemsize
    cost = pl.CostEstimate(
        flops=2 * B_pad * D * D + 2 * B_pad * D * E,
        transcendentals=0,
        bytes_accessed=itemsize * (D * D + D * E + B_pad * D + B_pad * E + D + E) + 4,
    )

    kernel = _make_fused_loss_kernel(B, B_pad, 1.0 / float(B * E))

    loss = pl.pallas_call(
        kernel,
        out_shape=jax.ShapeDtypeStruct((1,), jnp.float32),
        grid_spec=pltpu.PrefetchScalarGridSpec(
            num_scalar_prefetch=0,
            grid=(n_tiles,),
            in_specs=[
                pl.BlockSpec((B_pad, D), lambda j: (0, 0)),   # x: VMEM-resident across tiles
                pl.BlockSpec((D, TN), lambda j: (0, j)),      # w1: streamed column tiles
                pl.BlockSpec((1, TN), lambda j: (0, j)),      # b1: per-tile slice
                pl.BlockSpec((TN, E), lambda j: (j, 0)),      # w2: streamed row tiles
                pl.BlockSpec((1, E), lambda j: (0, 0)),       # b2: resident
                pl.BlockSpec((B_pad, E), lambda j: (0, 0)),   # clip: resident
            ],
            out_specs=pl.BlockSpec(memory_space=pltpu.MemorySpace.SMEM),
            scratch_shapes=[pltpu.VMEM((B_pad, E), jnp.float32)],
        ),
        compiler_params=pltpu.CompilerParams(
            dimension_semantics=("arbitrary",),     # accumulator carried across the tile axis
            vmem_limit_bytes=64 * 1024 * 1024,
        ),
        cost_estimate=cost,
    )(x, w1, b1, w2, b2, clip)
    return loss[0]


def init_params(key, frames_dim, embedding_dim, dtype=jnp.bfloat16):
    """Deterministic torch.nn.Linear-style init (uniform in +/- 1/sqrt(fan_in)),
    with weights pre-transposed to (in, out)."""
    k1, k2, k3, k4 = jax.random.split(key, 4)
    bound1 = 1.0 / float(jnp.sqrt(frames_dim))
    w1 = jax.random.uniform(k1, (frames_dim, frames_dim), jnp.float32, -bound1, bound1)
    b1 = jax.random.uniform(k2, (1, frames_dim), jnp.float32, -bound1, bound1)
    bound2 = 1.0 / float(jnp.sqrt(frames_dim))
    w2 = jax.random.uniform(k3, (frames_dim, embedding_dim), jnp.float32, -bound2, bound2)
    b2 = jax.random.uniform(k4, (1, embedding_dim), jnp.float32, -bound2, bound2)
    return (w1.astype(dtype), b1.astype(dtype), w2.astype(dtype), b2.astype(dtype))


if __name__ == "__main__":
    # Small shapes consistent with the module: frames (B, T, H, W, C) -> D = T*H*W*C.
    B, T, H, W, C = 2, 2, 8, 8, 3          # D = 2*8*8*3 = 384 (multiple of 128)
    D = T * H * W * C
    E = 128                                # embedding_dim (small stand-in for 512)

    key = jax.random.PRNGKey(0)
    k_frames, k_clip, k_params = jax.random.split(key, 3)

    frames = jax.random.normal(k_frames, (B, T, H, W, C), jnp.float32).astype(jnp.bfloat16)
    clip_embeddings = jax.random.normal(k_clip, (B, E), jnp.float32).astype(jnp.bfloat16)
    params = init_params(k_params, D, E)

    loss = dummy_model_loss(frames, clip_embeddings, params)
    jax.block_until_ready(loss)

    # reference check in plain JAX (mirrors kernel precision: half h, f32 accumulation)
    x = frames.reshape(B, -1).astype(jnp.float32)
    w1, b1, w2, b2 = [p.astype(jnp.float32) for p in params]
    h = jnp.maximum(x @ w1 + b1, 0.0).astype(jnp.bfloat16).astype(jnp.float32)
    e = h @ w2 + b2
    ref = jnp.mean((e - clip_embeddings.astype(jnp.float32)) ** 2)
    assert jnp.allclose(loss, ref, rtol=2e-2, atol=2e-2), (loss, ref)

    print("KERNEL_OK")
</pallas_src>

<mosaic_0001>
module attributes {stable_mosaic.version = 11 : i64} {
  func.func @kernel(%arg0: i32, %arg1: memref<8x384xbf16, #tpu.memory_space<vmem>>, %arg2: memref<384x128xbf16, #tpu.memory_space<vmem>>, %arg3: memref<1x128xbf16, #tpu.memory_space<vmem>>, %arg4: memref<128x128xbf16, #tpu.memory_space<vmem>>, %arg5: memref<1x128xbf16, #tpu.memory_space<vmem>>, %arg6: memref<8x128xbf16, #tpu.memory_space<vmem>>, %arg7: memref<1xf32, #tpu.memory_space<smem>>, %arg8: memref<8x128xf32, #tpu.memory_space<vmem>>) attributes {dimension_semantics = [#tpu.dimension_semantics<arbitrary>], iteration_bounds = array<i64: 3>, scalar_prefetch = 0 : i64, scratch_operands = 1 : i64, tpu.core_type = #tpu.core_type<tc>, window_params = [{pipeline_mode = #tpu.pipeline_mode<synchronous>, transform_indices = @transform_0, window_bounds = array<i64: 8, 384>}, {transform_indices = @transform_1, window_bounds = array<i64: 384, 128>}, {transform_indices = @transform_2, window_bounds = array<i64: 1, 128>}, {transform_indices = @transform_3, window_bounds = array<i64: 128, 128>}, {pipeline_mode = #tpu.pipeline_mode<synchronous>, transform_indices = @transform_4, window_bounds = array<i64: 1, 128>}, {pipeline_mode = #tpu.pipeline_mode<synchronous>, transform_indices = @transform_5, window_bounds = array<i64: 8, 128>}, {transform_indices = @transform_6, window_bounds = array<i64: 1>}]} {
    %c0_i32 = arith.constant 0 : i32
    %0 = arith.cmpi eq, %arg0, %c0_i32 : i32
    %1 = arith.extui %0 : i1 to i32
    %c0_i32_0 = arith.constant 0 : i32
    %2 = arith.cmpi ne, %1, %c0_i32_0 : i32
    scf.if %2 {
      %cst_15 = arith.constant 0.000000e+00 : f32
      %21 = vector.broadcast %cst_15 : f32 to vector<8x128xf32>
      %c0_16 = arith.constant 0 : index
      %c0_17 = arith.constant 0 : index
      %22 = vector.load %arg8[%c0_16, %c0_17] : memref<8x128xf32, #tpu.memory_space<vmem>>, vector<8x128xf32>
      tpu.vector_store %arg8[%c0_16, %c0_17], %21 {strides = array<i32>} : memref<8x128xf32, #tpu.memory_space<vmem>>, vector<8x128xf32>,
    } else {
    }
    %c0 = arith.constant 0 : index
    %c0_1 = arith.constant 0 : index
    %3 = vector.load %arg1[%c0, %c0_1] : memref<8x384xbf16, #tpu.memory_space<vmem>>, vector<8x384xbf16>
    %c0_2 = arith.constant 0 : index
    %c0_3 = arith.constant 0 : index
    %4 = vector.load %arg2[%c0_2, %c0_3] : memref<384x128xbf16, #tpu.memory_space<vmem>>, vector<384x128xbf16>
    %cst = arith.constant dense<0.000000e+00> : vector<8x128xf32>
    %5 = tpu.matmul %3, %4, %cst {dimension_numbers = #tpu.dot_dimension_numbers<[1], [0], [0], [1], [0, 0, 1, 1], [], []>} : vector<8x384xbf16>, vector<384x128xbf16>, vector<8x128xf32> -> vector<8x128xf32>
    %c0_4 = arith.constant 0 : index
    %c0_5 = arith.constant 0 : index
    %6 = vector.load %arg3[%c0_4, %c0_5] : memref<1x128xbf16, #tpu.memory_space<vmem>>, vector<1x128xbf16>
    %7 = arith.extf %6 : vector<1x128xbf16> to vector<1x128xf32>
    %8 = vector.broadcast %7 : vector<1x128xf32> to vector<8x128xf32>
    %9 = arith.addf %5, %8 : vector<8x128xf32>
    %cst_6 = arith.constant 0.000000e+00 : f32
    %10 = vector.broadcast %cst_6 : f32 to vector<8x128xf32>
    %11 = arith.maximumf %9, %10 : vector<8x128xf32>
    %12 = arith.truncf %11 : vector<8x128xf32> to vector<8x128xbf16>
    %c0_7 = arith.constant 0 : index
    %c0_8 = arith.constant 0 : index
    %13 = vector.load %arg8[%c0_7, %c0_8] : memref<8x128xf32, #tpu.memory_space<vmem>>, vector<8x128xf32>
    %c0_9 = arith.constant 0 : index
    %c0_10 = arith.constant 0 : index
    %14 = vector.load %arg4[%c0_9, %c0_10] : memref<128x128xbf16, #tpu.memory_space<vmem>>, vector<128x128xbf16>
    %cst_11 = arith.constant dense<0.000000e+00> : vector<8x128xf32>
    %15 = tpu.matmul %12, %14, %cst_11 {dimension_numbers = #tpu.dot_dimension_numbers<[1], [0], [0], [1], [0, 0, 1, 1], [], []>} : vector<8x128xbf16>, vector<128x128xbf16>, vector<8x128xf32> -> vector<8x128xf32>
    %16 = arith.addf %13, %15 : vector<8x128xf32>
    %c0_12 = arith.constant 0 : index
    %c0_13 = arith.constant 0 : index
    %17 = vector.load %arg8[%c0_12, %c0_13] : memref<8x128xf32, #tpu.memory_space<vmem>>, vector<8x128xf32>
    tpu.vector_store %arg8[%c0_12, %c0_13], %16 {strides = array<i32>} : memref<8x128xf32, #tpu.memory_space<vmem>>, vector<8x128xf32>,
    %c2_i32 = arith.constant 2 : i32
    %18 = arith.cmpi eq, %arg0, %c2_i32 : i32
    %19 = arith.extui %18 : i1 to i32
    %c0_i32_14 = arith.constant 0 : i32
    %20 = arith.cmpi ne, %19, %c0_i32_14 : i32
    scf.if %20 {
      %c0_15 = arith.constant 0 : index
      %c0_16 = arith.constant 0 : index
      %21 = vector.load %arg8[%c0_15, %c0_16] : memref<8x128xf32, #tpu.memory_space<vmem>>, vector<8x128xf32>
      %c0_17 = arith.constant 0 : index
      %c0_18 = arith.constant 0 : index
      %22 = vector.load %arg5[%c0_17, %c0_18] : memref<1x128xbf16, #tpu.memory_space<vmem>>, vector<1x128xbf16>
      %23 = arith.extf %22 : vector<1x128xbf16> to vector<1x128xf32>
      %24 = vector.broadcast %23 : vector<1x128xf32> to vector<8x128xf32>
      %25 = arith.addf %21, %24 : vector<8x128xf32>
      %c0_19 = arith.constant 0 : index
      %c0_20 = arith.constant 0 : index
      %26 = vector.load %arg6[%c0_19, %c0_20] : memref<8x128xbf16, #tpu.memory_space<vmem>>, vector<8x128xbf16>
      %27 = arith.extf %26 : vector<8x128xbf16> to vector<8x128xf32>
      %28 = arith.subf %25, %27 : vector<8x128xf32>
      %29 = tpu.iota {dimensions = array<i32: 0>} : vector<8x128xi32>
      %c2_i32_21 = arith.constant 2 : i32
      %30 = vector.broadcast %c2_i32_21 : i32 to vector<8x128xi32>
      %31 = arith.cmpi slt, %29, %30 : vector<8x128xi32>
      %cst_22 = arith.constant 0.000000e+00 : f32
      %32 = vector.broadcast %cst_22 : f32 to vector<8x128xf32>
      %33 = arith.select %31, %28, %32 : vector<8x128xi1>, vector<8x128xf32>
      %34 = arith.mulf %33, %33 : vector<8x128xf32>
      %35 = vector.shape_cast %34 : vector<8x128xf32> to vector<1x8x128xf32>
      %cst_23 = arith.constant dense<0.000000e+00> : vector<1xf32>
      %36 = vector.multi_reduction <add>, %35, %cst_23 [1, 2] : vector<1x8x128xf32> to vector<1xf32>
      %37 = vector.shape_cast %36 : vector<1xf32> to vector<1x1x1xf32>
      %38 = vector.extract %37[0, 0, 0] : f32 from vector<1x1x1xf32>
      %cst_24 = arith.constant 3.906250e-03 : f32
      %39 = arith.mulf %38, %cst_24 : f32
      %c0_25 = arith.constant 0 : index
      %40 = memref.load %arg7[%c0_25] : memref<1xf32, #tpu.memory_space<smem>>
      memref.store %39, %arg7[%c0_25] : memref<1xf32, #tpu.memory_space<smem>>
    } else {
    }
    return
  }
  func.func @transform_0(%arg0: i32) -> (i32, i32) {
    %c0_i32 = arith.constant 0 : i32
    %c0_i32_0 = arith.constant 0 : i32
    %c0_i32_1 = arith.constant 0 : i32
    return %c0_i32, %c0_i32_0 : i32, i32
  }
  func.func @transform_1(%arg0: i32) -> (i32, i32) {
    %c0_i32 = arith.constant 0 : i32
    %c0_i32_0 = arith.constant 0 : i32
    return %c0_i32, %arg0 : i32, i32
  }
  func.func @transform_2(%arg0: i32) -> (i32, i32) {
    %c0_i32 = arith.constant 0 : i32
    %c0_i32_0 = arith.constant 0 : i32
    return %c0_i32, %arg0 : i32, i32
  }
  func.func @transform_3(%arg0: i32) -> (i32, i32) {
    %c0_i32 = arith.constant 0 : i32
    %c0_i32_0 = arith.constant 0 : i32
    return %arg0, %c0_i32 : i32, i32
  }
  func.func @transform_4(%arg0: i32) -> (i32, i32) {
    %c0_i32 = arith.constant 0 : i32
    %c0_i32_0 = arith.constant 0 : i32
    %c0_i32_1 = arith.constant 0 : i32
    return %c0_i32, %c0_i32_0 : i32, i32
  }
  func.func @transform_5(%arg0: i32) -> (i32, i32) {
    %c0_i32 = arith.constant 0 : i32
    %c0_i32_0 = arith.constant 0 : i32
    %c0_i32_1 = arith.constant 0 : i32
    return %c0_i32, %c0_i32_0 : i32, i32
  }
  func.func @transform_6(%arg0: i32) -> i32 {
    %c0_i32 = arith.constant 0 : i32
    %c0_i32_0 = arith.constant 0 : i32
    return %c0_i32 : i32
  }
}

</mosaic_0001>

<llo_original>
// kernel: tpu_custom_call.1
$region0: #{tpu_custom_call.1}
  #allocation0 [shape = 'u32[]', space=smem, size = 0x4, offset = 0x4, fixed_abs, tag = 'smem constant byte address 0x4 - core index']
  #allocation1 [shape = 'u32[144,128]{1,0:T(1,128)}', space=vmem, size = 0x12000, scoped, tag = 'internal scratch']
  #allocation2 [shape = 'f32[8,128]{1,0:T(8,128)}', space=vmem, size = 0x1000, scoped, tag = 'scratch operand']
  %s0 = inlined_call_operand.hbm [shape: bf16[8,384], index: 0, kind: input, shape index: {}]
  %s1 = inlined_call_operand.hbm [shape: bf16[384,384], index: 1, kind: input, shape index: {}]
  %s2 = inlined_call_operand.hbm [shape: bf16[1,384], index: 2, kind: input, shape index: {}]
  %s3 = inlined_call_operand.hbm [shape: bf16[384,128], index: 3, kind: input, shape index: {}]
  %s4 = inlined_call_operand.hbm [shape: bf16[1,128], index: 4, kind: input, shape index: {}]
  %s5 = inlined_call_operand.hbm [shape: bf16[8,128], index: 5, kind: input, shape index: {}]
  %s6 = inlined_call_operand.hbm [shape: f32[1], index: 6, kind: output, shape index: {}]
  %s7 = sld [smem:[#allocation0]]
  $region89: #{tpu_custom_call.1} parent=0
    _
  %s9 = ssub.s32 1, %s7
  %s10 = scalar_select 0, %s9, %s7
  $region1: #{tpu_custom_call.1} parent=0
    #allocation3 [shape = 'u8[6144]{0}', space=vmem, size = 0x1800, scoped, tag = 'input window, operand 0, single buffered']
    #allocation4 [shape = 's32[2]{0}', space=sflag, size = 0x8, scoped, tag = 'scoped memory for tpu_custom_call.1']
    #allocation5 [shape = 's32[2]{0}', space=sflag, size = 0x8, scoped, tag = 'scoped memory for tpu_custom_call.1']
    #allocation6 [shape = 'u8[196608]{0}', space=vmem, size = 0x30000, scoped, tag = 'input window, operand 1']
    #allocation7 [shape = 's32[2]{0}', space=sflag, size = 0x8, scoped, tag = 'scoped memory for tpu_custom_call.1']
    #allocation8 [shape = 'u8[1024]{0}', space=vmem, size = 0x400, scoped, tag = 'input window, operand 2']
    #allocation9 [shape = 'u8[65536]{0}', space=vmem, size = 0x10000, scoped, tag = 'input window, operand 3']
    #allocation10 [shape = 's32[2]{0}', space=sflag, size = 0x8, scoped, tag = 'scoped memory for tpu_custom_call.1']
    #allocation11 [shape = 'u8[512]{0}', space=vmem, size = 0x400, scoped, tag = 'input window, operand 4, single buffered']
    #allocation12 [shape = 'u8[2048]{0}', space=vmem, size = 0x800, scoped, tag = 'input window, operand 5, single buffered']
    #allocation13 [shape = 's32[1]{0}', space=sflag, size = 0x4, scoped, tag = 'scoped memory for tpu_custom_call.1']
    #allocation14 [shape = 'u8[512]{0}', space=smem, size = 0x200, scoped, tag = 'output window, operand 0, single buffered']
    %11 = vsyncpa [#allocation4], 0
    %12 = vsyncpa [#allocation7], 0
    %s13 = scalar_lea.sflag [#allocation7], 1
    %14 = vsyncpa %s13, 0
    %15 = vsyncpa [#allocation10], 0
    %s16 = scalar_lea.sflag [#allocation10], 1
    %17 = vsyncpa %s16, 0
    %18 = vsyncpa [#allocation13], 0
    %19 = vsyncpa [#allocation5], 0
    loop: start=0, step=1, limit=5
    $region2: #{tpu_custom_call.1} parent=1 // loop_pre_header
      _
    $region3: #{tpu_custom_call.1} parent=1 // loop_header
      %s21 = sphi 0, %s25
      %p22 = scmp.ge.s32.totalorder %s21, 5
      %s29 = sphi 0, %s29
      %s31 = sphi 0, %s29
      %s32 = sphi 0, %s31
      %s46 = sphi 0, %s32
      %s52 = sphi 0, %s54
      %s55 = sphi 0, %s52
      %s56 = sphi 0, %s55
      %s72 = sphi 0, %s56
      %s78 = sphi 0, %s80
      %s81 = sphi 0, %s78
      %s82 = sphi 0, %s81
      %s98 = sphi 0, %s82
      %s104 = sphi 0, %s106
      %s107 = sphi 0, %s104
      %s108 = sphi 0, %s107
      %s124 = sphi 0, %s108
      %s128 = sphi 0, %s128
      %s130 = sphi 0, %s128
      %s131 = sphi 0, %s130
      %s145 = sphi 0, %s131
      %s149 = sphi 0, %s149
      %s151 = sphi 0, %s149
      %s152 = sphi 0, %s151
      %s166 = sphi 0, %s152
      %s170 = sphi 0, %s170
      %s172 = sphi 0, %s170
      %s173 = sphi 0, %s172
      %s187 = sphi 0, %s173
    $region4: #{tpu_custom_call.1} parent=1 // loop_header_branch
      %24 = sbr.rel (%p22) target = $region8
    $region5: #{tpu_custom_call.1} parent=1 // loop_body
      %s26 = ssub.s32 %s21, 1
      %s27 = ssub.s32 %s21, 2
      %s28 = sadd.s32 %s21, 1
      %s30 = sadd.s32 %s29, 1
      %p33 = scmp.eq.s32.totalorder %s21, 2
      %p34 = scmp.ne.s32.totalorder %s29, %s31
      %p35 = scmp.eq.s32.totalorder %s21, 0
      %p36 = por %p34, %p35
      %p37 = scmp.ne.s32.totalorder %s29, %s31
      %p38 = scmp.eq.s32.totalorder %s26, 2
      %p39 = por %p37, %p38
      %p40 = scmp.ne.s32.totalorder %s31, %s32
      %p41 = scmp.eq.s32.totalorder %s26, 0
      %p42 = por %p40, %p41
      %p43 = scmp.ne.s32.totalorder %s31, %s32
      %p44 = scmp.eq.s32.totalorder %s27, 2
      %p45 = por %p43, %p44
      %p47 = scmp.ne.s32.totalorder %s32, %s46
      %p48 = scmp.eq.s32.totalorder %s27, 0
      %p49 = por %p47, %p48
      %s50 = ssub.s32 %s21, %s28
      %p51 = scmp.eq.s32.totalorder %s50, 0
      %s53 = sadd.s32 %s52, 1
      %s54 = scalar_select %p51, %s52, %s53
      %p57 = pneg %p51
      %p58 = scmp.eq.s32.totalorder %s21, 2
      %p59 = por %p57, %p58
      %p60 = scmp.ne.s32.totalorder %s52, %s55
      %p61 = scmp.eq.s32.totalorder %s21, 0
      %p62 = por %p60, %p61
      %p63 = scmp.ne.s32.totalorder %s52, %s55
      %p64 = scmp.eq.s32.totalorder %s26, 2
      %p65 = por %p63, %p64
      %p66 = scmp.ne.s32.totalorder %s55, %s56
      %p67 = scmp.eq.s32.totalorder %s26, 0
      %p68 = por %p66, %p67
      %p69 = scmp.ne.s32.totalorder %s55, %s56
      %p70 = scmp.eq.s32.totalorder %s27, 2
      %p71 = por %p69, %p70
      %p73 = scmp.ne.s32.totalorder %s56, %s72
      %p74 = scmp.eq.s32.totalorder %s27, 0
      %p75 = por %p73, %p74
      %s76 = ssub.s32 %s21, %s28
      %p77 = scmp.eq.s32.totalorder %s76, 0
      %s79 = sadd.s32 %s78, 1
      %s80 = scalar_select %p77, %s78, %s79
      %p83 = pneg %p77
      %p84 = scmp.eq.s32.totalorder %s21, 2
      %p85 = por %p83, %p84
      %p86 = scmp.ne.s32.totalorder %s78, %s81
      %p87 = scmp.eq.s32.totalorder %s21, 0
      %p88 = por %p86, %p87
      %p89 = scmp.ne.s32.totalorder %s78, %s81
      %p90 = scmp.eq.s32.totalorder %s26, 2
      %p91 = por %p89, %p90
      %p92 = scmp.ne.s32.totalorder %s81, %s82
      %p93 = scmp.eq.s32.totalorder %s26, 0
      %p94 = por %p92, %p93
      %p95 = scmp.ne.s32.totalorder %s81, %s82
      %p96 = scmp.eq.s32.totalorder %s27, 2
      %p97 = por %p95, %p96
      %p99 = scmp.ne.s32.totalorder %s82, %s98
      %p100 = scmp.eq.s32.totalorder %s27, 0
      %p101 = por %p99, %p100
      %s102 = ssub.s32 %s21, %s28
      %p103 = scmp.eq.s32.totalorder %s102, 0
      %s105 = sadd.s32 %s104, 1
      %s106 = scalar_select %p103, %s104, %s105
      %p109 = pneg %p103
      %p110 = scmp.eq.s32.totalorder %s21, 2
      %p111 = por %p109, %p110
      %p112 = scmp.ne.s32.totalorder %s104, %s107
      %p113 = scmp.eq.s32.totalorder %s21, 0
      %p114 = por %p112, %p113
      %p115 = scmp.ne.s32.totalorder %s104, %s107
      %p116 = scmp.eq.s32.totalorder %s26, 2
      %p117 = por %p115, %p116
      %p118 = scmp.ne.s32.totalorder %s107, %s108
      %p119 = scmp.eq.s32.totalorder %s26, 0
      %p120 = por %p118, %p119
      %p121 = scmp.ne.s32.totalorder %s107, %s108
      %p122 = scmp.eq.s32.totalorder %s27, 2
      %p123 = por %p121, %p122
      %p125 = scmp.ne.s32.totalorder %s108, %s124
      %p126 = scmp.eq.s32.totalorder %s27, 0
      %p127 = por %p125, %p126
      %s129 = sadd.s32 %s128, 1
      %p132 = scmp.eq.s32.totalorder %s21, 2
      %p133 = scmp.ne.s32.totalorder %s128, %s130
      %p134 = scmp.eq.s32.totalorder %s21, 0
      %p135 = por %p133, %p134
      %p136 = scmp.ne.s32.totalorder %s128, %s130
      %p137 = scmp.eq.s32.totalorder %s26, 2
      %p138 = por %p136, %p137
      %p139 = scmp.ne.s32.totalorder %s130, %s131
      %p140 = scmp.eq.s32.totalorder %s26, 0
      %p141 = por %p139, %p140
      %p142 = scmp.ne.s32.totalorder %s130, %s131
      %p143 = scmp.eq.s32.totalorder %s27, 2
      %p144 = por %p142, %p143
      %p146 = scmp.ne.s32.totalorder %s131, %s145
      %p147 = scmp.eq.s32.totalorder %s27, 0
      %p148 = por %p146, %p147
      %s150 = sadd.s32 %s149, 1
      %p153 = scmp.eq.s32.totalorder %s21, 2
      %p154 = scmp.ne.s32.totalorder %s149, %s151
      %p155 = scmp.eq.s32.totalorder %s21, 0
      %p156 = por %p154, %p155
      %p157 = scmp.ne.s32.totalorder %s149, %s151
      %p158 = scmp.eq.s32.totalorder %s26, 2
      %p159 = por %p157, %p158
      %p160 = scmp.ne.s32.totalorder %s151, %s152
      %p161 = scmp.eq.s32.totalorder %s26, 0
      %p162 = por %p160, %p161
      %p163 = scmp.ne.s32.totalorder %s151, %s152
      %p164 = scmp.eq.s32.totalorder %s27, 2
      %p165 = por %p163, %p164
      %p167 = scmp.ne.s32.totalorder %s152, %s166
      %p168 = scmp.eq.s32.totalorder %s27, 0
      %p169 = por %p167, %p168
      %s171 = sadd.s32 %s170, 1
      %p174 = scmp.eq.s32.totalorder %s21, 2
      %p175 = scmp.ne.s32.totalorder %s170, %s172
      %p176 = scmp.eq.s32.totalorder %s21, 0
      %p177 = por %p175, %p176
      %p178 = scmp.ne.s32.totalorder %s170, %s172
      %p179 = scmp.eq.s32.totalorder %s26, 2
      %p180 = por %p178, %p179
      %p181 = scmp.ne.s32.totalorder %s172, %s173
      %p182 = scmp.eq.s32.totalorder %s26, 0
      %p183 = por %p181, %p182
      %p184 = scmp.ne.s32.totalorder %s172, %s173
      %p185 = scmp.eq.s32.totalorder %s27, 2
      %p186 = por %p184, %p185
      %p188 = scmp.ne.s32.totalorder %s173, %s187
      %p189 = scmp.eq.s32.totalorder %s27, 0
      %p190 = por %p188, %p189
      %p191 = scmp.le.s32.totalorder 1, %s21
      %p192 = scmp.lt.s32.totalorder %s21, 4
      %p193 = pnand %p191, %p192
      %p194 = pneg %p193
      // Predicated region
      $region9: #{tpu_custom_call.1} parent=5 // pred_check
        _
      $region10: #{tpu_custom_call.1} parent=5 // pred_check_branch
        %196 = sbr.rel (%p193) target = $region12
      $region11: #{tpu_custom_call.1} parent=5 // pred_region
        %s197 = ssub.s32 %s21, 1
        // Predicated region
        $region13: #{tpu_custom_call.1} parent=11 // pred_check
          %p198 = pneg %p42
        $region14: #{tpu_custom_call.1} parent=11 // pred_check_branch
          %200 = sbr.rel (%p198) target = $region16
        $region15: #{tpu_custom_call.1} parent=11 // pred_region
          %s202 = ssub.s32 192, 192
          %203 = vsyncadd [#allocation4], %s202
          %s205 = sshll.u32 [#allocation3], 4
          %s206 = int_to_ptr.vmem [resolvable:$true] %s205
          %208 = dma.hbm_to_vmem [thread:$0]  %s0, 192, %s206, [#allocation4]
        $region16: #{tpu_custom_call.1} parent=11 // pred_fallthru
          _
        // Predicated region
        $region17: #{tpu_custom_call.1} parent=11 // pred_check
          %p209 = pneg %p141
        $region18: #{tpu_custom_call.1} parent=11 // pred_check_branch
          %211 = sbr.rel (%p209) target = $region20
        $region19: #{tpu_custom_call.1} parent=11 // pred_region
          %s213 = ssub.s32 16, 16
          %214 = vsyncadd [#allocation10], %s213
          %s216 = sshll.u32 [#allocation11], 4
          %s217 = int_to_ptr.vmem [resolvable:$true] %s216
          %219 = dma.hbm_to_vmem [thread:$0]  %s4, 16, %s217, [#allocation10]
        $region20: #{tpu_custom_call.1} parent=11 // pred_fallthru
          _
        // Predicated region
        $region21: #{tpu_custom_call.1} parent=11 // pred_check
          %p220 = pneg %p162
        $region22: #{tpu_custom_call.1} parent=11 // pred_check_branch
          %222 = sbr.rel (%p220) target = $region24
        $region23: #{tpu_custom_call.1} parent=11 // pred_region
          %s224 = ssub.s32 64, 64
          %225 = vsyncadd [#allocation13], %s224
          %s227 = sshll.u32 [#allocation12], 4
          %s228 = int_to_ptr.vmem [resolvable:$true] %s227
          %230 = dma.hbm_to_vmem [thread:$0]  %s5, 64, %s228, [#allocation13]
        $region24: #{tpu_custom_call.1} parent=11 // pred_fallthru
          _
      $region12: #{tpu_custom_call.1} parent=5 // pred_fallthru
        _
      %p231 = scmp.lt.s32.totalorder %s21, 3
      // Predicated region
      $region25: #{tpu_custom_call.1} parent=5 // pred_check
        %p232 = pneg %p231
      $region26: #{tpu_custom_call.1} parent=5 // pred_check_branch
        %234 = sbr.rel (%p232) target = $region28
      $region27: #{tpu_custom_call.1} parent=5 // pred_region
        // Predicated region
        $region29: #{tpu_custom_call.1} parent=27 // pred_check
          %p235 = pneg %p62
        $region30: #{tpu_custom_call.1} parent=27 // pred_check_branch
          %237 = sbr.rel (%p235) target = $region32
        $region31: #{tpu_custom_call.1} parent=27 // pred_region
          %s238 = sand.u32 %s21, 1
          %s239 = scalar_lea.sflag [#allocation7], %s238
          %s240 = sand.u32 %s52, 1
          %s241 = smul.addr %s240, 192
          %s242 = scalar_lea.vmem [#allocation6], %s241
          %s244 = ssub.s32 3072, 3072
          %245 = vsyncadd %s239, %s244
          %s246 = smul.addr %s21, 64
          %s247 = scalar_lea.hbm %s1, %s246
          %s248 = sshll.u32 %s242, 4
          %s249 = int_to_ptr.vmem [resolvable:$true] %s248
          %254 = dma.hbm_to_vmem [thread:$0]  %s247, 3072, %s249, %s239, 192, 64, 4
        $region32: #{tpu_custom_call.1} parent=27 // pred_fallthru
          _
        // Predicated region
        $region33: #{tpu_custom_call.1} parent=27 // pred_check
          %p255 = pneg %p88
        $region34: #{tpu_custom_call.1} parent=27 // pred_check_branch
          %257 = sbr.rel (%p255) target = $region36
        $region35: #{tpu_custom_call.1} parent=27 // pred_region
          %s258 = sand.u32 %s21, 1
          %s259 = scalar_lea.sflag [#allocation7], %s258
          %s260 = sand.u32 %s78, 1
          %s261 = scalar_lea.vmem [#allocation8], %s260
          %s263 = ssub.s32 16, 16
          %264 = vsyncadd %s259, %s263
          %s265 = smul.addr %s21, 16
          %s266 = scalar_lea.hbm %s2, %s265
          %s268 = sshll.u32 %s261, 4
          %s269 = int_to_ptr.vmem [resolvable:$true] %s268
          %271 = dma.hbm_to_vmem [thread:$0]  %s266, 16, %s269, %s259
        $region36: #{tpu_custom_call.1} parent=27 // pred_fallthru
          _
        // Predicated region
        $region37: #{tpu_custom_call.1} parent=27 // pred_check
          %p272 = pneg %p114
        $region38: #{tpu_custom_call.1} parent=27 // pred_check_branch
          %274 = sbr.rel (%p272) target = $region40
        $region39: #{tpu_custom_call.1} parent=27 // pred_region
          %s275 = sand.u32 %s21, 1
          %s276 = scalar_lea.sflag [#allocation10], %s275
          %s277 = sand.u32 %s104, 1
          %s278 = smul.addr %s277, 64
          %s279 = scalar_lea.vmem [#allocation9], %s278
          %s280 = smul.u32 16, %s21
          %s282 = ssub.s32 1024, 1024
          %283 = vsyncadd %s276, %s282
          %s284 = smul.addr %s280, 64
          %s285 = scalar_lea.hbm %s3, %s284
          %s286 = sshll.u32 %s279, 4
          %s287 = int_to_ptr.vmem [resolvable:$true] %s286
          %292 = dma.hbm_to_vmem [thread:$0]  %s285, 1024, %s287, %s276, 64, 64, 4
        $region40: #{tpu_custom_call.1} parent=27 // pred_fallthru
          _
      $region28: #{tpu_custom_call.1} parent=5 // pred_fallthru
        _
      %p293 = scmp.le.s32.totalorder 1, %s21
      %p294 = scmp.lt.s32.totalorder %s21, 4
      %p295 = pnand %p293, %p294
      %p296 = pneg %p295
      // Predicated region
      $region41: #{tpu_custom_call.1} parent=5 // pred_check
        _
      $region42: #{tpu_custom_call.1} parent=5 // pred_check_branch
        %298 = sbr.rel (%p295) target = $region44
      $region43: #{tpu_custom_call.1} parent=5 // pred_region
        %s299 = ssub.s32 %s21, 1
        // Predicated region
        $region45: #{tpu_custom_call.1} parent=43 // pred_check
          %p300 = pneg %p42
        $region46: #{tpu_custom_call.1} parent=43 // pred_check_branch
          %302 = sbr.rel (%p300) target = $region48
        $region47: #{tpu_custom_call.1} parent=43 // pred_region
          %303 = dma.done [#allocation4], 192
        $region48: #{tpu_custom_call.1} parent=43 // pred_fallthru
          _
        %s304 = sand.u32 %s26, 1
        %s305 = scalar_lea.sflag [#allocation7], %s304
        %s306 = sand.u32 %s55, 1
        %s307 = smul.addr %s306, 192
        %s308 = scalar_lea.vmem [#allocation6], %s307
        // Predicated region
        $region49: #{tpu_custom_call.1} parent=43 // pred_check
          %p309 = pneg %p68
        $region50: #{tpu_custom_call.1} parent=43 // pred_check_branch
          %311 = sbr.rel (%p309) target = $region52
        $region51: #{tpu_custom_call.1} parent=43 // pred_region
          %312 = dma.done %s305, 3072
        $region52: #{tpu_custom_call.1} parent=43 // pred_fallthru
          _
        %s313 = sand.u32 %s26, 1
        %s314 = scalar_lea.sflag [#allocation7], %s313
        %s315 = sand.u32 %s81, 1
        %s316 = scalar_lea.vmem [#allocation8], %s315
        // Predicated region
        $region53: #{tpu_custom_call.1} parent=43 // pred_check
          %p317 = pneg %p94
        $region54: #{tpu_custom_call.1} parent=43 // pred_check_branch
          %319 = sbr.rel (%p317) target = $region56
        $region55: #{tpu_custom_call.1} parent=43 // pred_region
          %320 = dma.done %s314, 16
        $region56: #{tpu_custom_call.1} parent=43 // pred_fallthru
          _
        %s321 = sand.u32 %s26, 1
        %s322 = scalar_lea.sflag [#allocation10], %s321
        %s323 = sand.u32 %s107, 1
        %s324 = smul.addr %s323, 64
        %s325 = scalar_lea.vmem [#allocation9], %s324
        // Predicated region
        $region57: #{tpu_custom_call.1} parent=43 // pred_check
          %p326 = pneg %p120
        $region58: #{tpu_custom_call.1} parent=43 // pred_check_branch
          %328 = sbr.rel (%p326) target = $region60
        $region59: #{tpu_custom_call.1} parent=43 // pred_region
          %329 = dma.done %s322, 1024
        $region60: #{tpu_custom_call.1} parent=43 // pred_fallthru
          _
        // Predicated region
        $region61: #{tpu_custom_call.1} parent=43 // pred_check
          %p330 = pneg %p141
        $region62: #{tpu_custom_call.1} parent=43 // pred_check_branch
          %332 = sbr.rel (%p330) target = $region64
        $region63: #{tpu_custom_call.1} parent=43 // pred_region
          %333 = dma.done [#allocation10], 16
        $region64: #{tpu_custom_call.1} parent=43 // pred_fallthru
          _
        // Predicated region
        $region65: #{tpu_custom_call.1} parent=43 // pred_check
          %p334 = pneg %p162
        $region66: #{tpu_custom_call.1} parent=43 // pred_check_branch
          %336 = sbr.rel (%p334) target = $region68
        $region67: #{tpu_custom_call.1} parent=43 // pred_region
          %337 = dma.done [#allocation13], 64
        $region68: #{tpu_custom_call.1} parent=43 // pred_fallthru
          _
        %p338 = pneg %p42
        %p339 = pneg %p39
        %s340 = sand.u32 %s26, 1
        %s341 = scalar_lea.sflag [#allocation7], %s340
        %s342 = sand.u32 %s55, 1
        %s343 = smul.addr %s342, 192
        %s344 = scalar_lea.vmem [#allocation6], %s343
        %p345 = pneg %p68
        %p346 = pneg %p65
        %s347 = sand.u32 %s26, 1
        %s348 = scalar_lea.sflag [#allocation7], %s347
        %s349 = sand.u32 %s81, 1
        %s350 = scalar_lea.vmem [#allocation8], %s349
        %p351 = pneg %p94
        %p352 = pneg %p91
        %s353 = sand.u32 %s26, 1
        %s354 = scalar_lea.sflag [#allocation10], %s353
        %s355 = sand.u32 %s107, 1
        %s356 = smul.addr %s355, 64
        %s357 = scalar_lea.vmem [#allocation9], %s356
        %p358 = pneg %p120
        %p359 = pneg %p117
        %p360 = pneg %p141
        %p361 = pneg %p138
        %p362 = pneg %p162
        %p363 = pneg %p159
        %p364 = pneg %p183
        %p365 = pneg %p180
        %s366 = smul.u32 16, %s26
        %p368 = scmp.eq.s32.totalorder %s26, 0
        // Predicated region
        $region69: #{tpu_custom_call.1} parent=43 // pred_check
          %p369 = pneg %p368
        $region70: #{tpu_custom_call.1} parent=43 // pred_check_branch
          %371 = sbr.rel (%p369) target = $region72
        $region71: #{tpu_custom_call.1} parent=43 // pred_region
          %372 = vst [vmem:[#allocation2] sm:$0xff] 0.0
        $region72: #{tpu_custom_call.1} parent=43 // pred_fallthru
          _
        %v373 = vld [vmem:[#allocation3] sm:$0xff]
        %v374 = vld [vmem:[#allocation3 + $0x8] sm:$0xf]
        %v375 = vld [vmem:[%s308] sm:$0xf]
        %v376 = vld [vmem:[%s308 + $0x4] sm:$0xf]
        %v377 = vld [vmem:[%s308 + $0x8] sm:$0xf]
        %v378 = vld [vmem:[%s308 + $0xc] sm:$0xf]
        %v379 = vld [vmem:[%s308 + $0x10] sm:$0xf]
        %v380 = vld [vmem:[%s308 + $0x14] sm:$0xf]
        %v381 = vld [vmem:[%s308 + $0x18] sm:$0xf]
        %v382 = vld [vmem:[%s308 + $0x1c] sm:$0xf]
        %v383 = vld [vmem:[%s308 + $0x20] sm:$0xf]
        %v384 = vld [vmem:[%s308 + $0x24] sm:$0xf]
        %v385 = vld [vmem:[%s308 + $0x28] sm:$0xf]
        %v386 = vld [vmem:[%s308 + $0x2c] sm:$0xf]
        %v387 = vld [vmem:[%s308 + $0x30] sm:$0xf]
        %v388 = vld [vmem:[%s308 + $0x34] sm:$0xf]
        %v389 = vld [vmem:[%s308 + $0x38] sm:$0xf]
        %v390 = vld [vmem:[%s308 + $0x3c] sm:$0xf]
        %v391 = vld [vmem:[%s308 + $0x40] sm:$0xf]
        %v392 = vld [vmem:[%s308 + $0x44] sm:$0xf]
        %v393 = vld [vmem:[%s308 + $0x48] sm:$0xf]
        %v394 = vld [vmem:[%s308 + $0x4c] sm:$0xf]
        %v395 = vld [vmem:[%s308 + $0x50] sm:$0xf]
        %v396 = vld [vmem:[%s308 + $0x54] sm:$0xf]
        %v397 = vld [vmem:[%s308 + $0x58] sm:$0xf]
        %v398 = vld [vmem:[%s308 + $0x5c] sm:$0xf]
        %v399 = vld [vmem:[%s308 + $0x60] sm:$0xf]
        %v400 = vld [vmem:[%s308 + $0x64] sm:$0xf]
        %v401 = vld [vmem:[%s308 + $0x68] sm:$0xf]
        %v402 = vld [vmem:[%s308 + $0x6c] sm:$0xf]
        %v403 = vld [vmem:[%s308 + $0x70] sm:$0xf]
        %v404 = vld [vmem:[%s308 + $0x74] sm:$0xf]
        %v405 = vld [vmem:[%s308 + $0x78] sm:$0xf]
        %v406 = vld [vmem:[%s308 + $0x7c] sm:$0xf]
        %v407 = vld [vmem:[%s308 + $0x80] sm:$0xf]
        %v408 = vld [vmem:[%s308 + $0x84] sm:$0xf]
        %v409 = vld [vmem:[%s308 + $0x88] sm:$0xf]
        %v410 = vld [vmem:[%s308 + $0x8c] sm:$0xf]
        %v411 = vld [vmem:[%s308 + $0x90] sm:$0xf]
        %v412 = vld [vmem:[%s308 + $0x94] sm:$0xf]
        %v413 = vld [vmem:[%s308 + $0x98] sm:$0xf]
        %v414 = vld [vmem:[%s308 + $0x9c] sm:$0xf]
        %v415 = vld [vmem:[%s308 + $0xa0] sm:$0xf]
        %v416 = vld [vmem:[%s308 + $0xa4] sm:$0xf]
        %v417 = vld [vmem:[%s308 + $0xa8] sm:$0xf]
        %v418 = vld [vmem:[%s308 + $0xac] sm:$0xf]
        %v419 = vld [vmem:[%s308 + $0xb0] sm:$0xf]
        %v420 = vld [vmem:[%s308 + $0xb4] sm:$0xf]
        %v421 = vld [vmem:[%s308 + $0xb8] sm:$0xf]
        %v422 = vld [vmem:[%s308 + $0xbc] sm:$0xf]
        %v423 = vld [vmem:[%s316] sm:$0x1]
        %v424 = vunpack.c.l.bf16 %v423
        %v425 = vlaneseq
        %v426 = vshrl.u32 %v425, 7
        %v427 = vsub.s32 0, %v426
        %v428 = vrot.slane %v424, %v427
        %v431 = vunpack.c.l.b16 %v373
        %v432 = vunpack.c.h.b16 %v373
        %v433 = vunpack.c.l.b16 %v374
        %v434 = vpack.c.b16 %v431, %v431
        %v435 = vpack.c.b16 %v432, %v432
        %v436 = vpack.c.b16 %v433, %v433
        %v488 = vunpack.c.l.b16 %v375
        %v489 = vunpack.c.l.b16 %v376
        %v490 = vunpack.c.l.b16 %v377
        %v491 = vunpack.c.l.b16 %v378
        %v492 = vunpack.c.l.b16 %v379
        %v493 = vunpack.c.l.b16 %v380
        %v494 = vunpack.c.l.b16 %v381
        %v495 = vunpack.c.l.b16 %v382
        %v496 = vunpack.c.l.b16 %v383
        %v497 = vunpack.c.l.b16 %v384
        %v498 = vunpack.c.l.b16 %v385
        %v499 = vunpack.c.l.b16 %v386
        %v500 = vunpack.c.l.b16 %v387
        %v501 = vunpack.c.l.b16 %v388
        %v502 = vunpack.c.l.b16 %v389
        %v503 = vunpack.c.l.b16 %v390
        %v504 = vunpack.c.l.b16 %v391
        %v505 = vunpack.c.l.b16 %v392
        %v506 = vunpack.c.l.b16 %v393
        %v507 = vunpack.c.l.b16 %v394
        %v508 = vunpack.c.l.b16 %v395
        %v509 = vunpack.c.l.b16 %v396
        %v510 = vunpack.c.l.b16 %v397
        %v511 = vunpack.c.l.b16 %v398
        %v512 = vunpack.c.l.b16 %v399
        %v513 = vunpack.c.l.b16 %v400
        %v514 = vunpack.c.l.b16 %v401
        %v515 = vunpack.c.l.b16 %v402
        %v516 = vunpack.c.l.b16 %v403
        %v517 = vunpack.c.l.b16 %v404
        %v518 = vunpack.c.l.b16 %v405
        %v519 = vunpack.c.l.b16 %v406
        %v520 = vunpack.c.l.b16 %v407
        %v521 = vunpack.c.l.b16 %v408
        %v522 = vunpack.c.l.b16 %v409
        %v523 = vunpack.c.l.b16 %v410
        %v524 = vunpack.c.l.b16 %v411
        %v525 = vunpack.c.l.b16 %v412
        %v526 = vunpack.c.l.b16 %v413
        %v527 = vunpack.c.l.b16 %v414
        %v528 = vunpack.c.l.b16 %v415
        %v529 = vunpack.c.l.b16 %v416
        %v530 = vunpack.c.l.b16 %v417
        %v531 = vunpack.c.l.b16 %v418
        %v532 = vunpack.c.l.b16 %v419
        %v533 = vunpack.c.l.b16 %v420
        %v534 = vunpack.c.l.b16 %v421
        %v535 = vunpack.c.l.b16 %v422
        %v536 = vpack.c.b16 %v489, %v488
        %v537 = vpack.c.b16 %v491, %v490
        %v538 = vpack.c.b16 %v493, %v492
        %v539 = vpack.c.b16 %v495, %v494
        %v540 = vpack.c.b16 %v497, %v496
        %v541 = vpack.c.b16 %v499, %v498
        %v542 = vpack.c.b16 %v501, %v500
        %v543 = vpack.c.b16 %v503, %v502
        %v544 = vpack.c.b16 %v505, %v504
        %v545 = vpack.c.b16 %v507, %v506
        %v546 = vpack.c.b16 %v509, %v508
        %v547 = vpack.c.b16 %v511, %v510
        %v548 = vpack.c.b16 %v513, %v512
        %v549 = vpack.c.b16 %v515, %v514
        %v550 = vpack.c.b16 %v517, %v516
        %v551 = vpack.c.b16 %v519, %v518
        %v552 = vpack.c.b16 %v521, %v520
        %v553 = vpack.c.b16 %v523, %v522
        %v554 = vpack.c.b16 %v525, %v524
        %v555 = vpack.c.b16 %v527, %v526
        %v556 = vpack.c.b16 %v529, %v528
        %v557 = vpack.c.b16 %v531, %v530
        %v558 = vpack.c.b16 %v533, %v532
        %v559 = vpack.c.b16 %v535, %v534
        %584 = vmatprep.subr.bf16.mxu0 0
        %585 = vmatpush1.bf16.msra.mxu0 %v536
        %586 = vmatprep.subr.bf16.mxu0 0
        %587 = vmatpush1.bf16.msra.mxu0 %v537
        %588 = vmatprep.subr.bf16.mxu0 0
        %589 = vmatpush1.bf16.msra.mxu0 %v538
        %590 = vmatprep.subr.bf16.mxu0 0
        %591 = vmatpush1.bf16.msra.mxu0 %v539
        %592 = vmatprep.subr.bf16.mxu0 0
        %593 = vmatpush1.bf16.msra.mxu0 %v540
        %594 = vmatprep.subr.bf16.mxu0 0
        %595 = vmatpush1.bf16.msra.mxu0 %v541
        %596 = vmatprep.subr.bf16.mxu0 0
        %597 = vmatpush1.bf16.msra.mxu0 %v542
        %598 = vmatprep.subr.bf16.mxu0 0
        %599 = vmatpush1.bf16.msra.mxu0 %v543
        %600 = vmatprep.subr.bf16.mxu0 0
        %601 = vmatpush1.bf16.msra.mxu0 %v544
        %602 = vmatprep.subr.bf16.mxu0 0
        %603 = vmatpush1.bf16.msra.mxu0 %v545
        %604 = vmatprep.subr.bf16.mxu0 0
        %605 = vmatpush1.bf16.msra.mxu0 %v546
        %606 = vmatprep.subr.bf16.mxu0 0
        %607 = vmatpush1.bf16.msra.mxu0 %v547
        %608 = vmatprep.subr.bf16.mxu0 0
        %609 = vmatpush1.bf16.msra.mxu0 %v548
        %610 = vmatprep.subr.bf16.mxu0 0
        %611 = vmatpush1.bf16.msra.mxu0 %v549
        %612 = vmatprep.subr.bf16.mxu0 0
        %613 = vmatpush1.bf16.msra.mxu0 %v550
        %614 = vmatprep.subr.bf16.mxu0 0
        %615 = vmatpush1.bf16.msra.mxu0 %v551
        %616 = vmatprep.mubr.bf16.mxu0 %v435
        %617 = vmatmul.mubr.bf16.gmra.mrb[0].mxu0 %v434
        %v618 = vpop.f32.mrb[0].mxu0
        %v619 = vadd.f32 %v428, %v618
        %v620 = vpop.f32.mrb[0].mxu0
        %v621 = vpop.f32.mrb[0].mxu0
        %v622 = vpop.f32.mrb[0].mxu0
        %623 = vdwg.mxu0
        %624 = vmatprep.subr.bf16.mxu0 0
        %625 = vmatpush1.bf16.msra.mxu0 %v552
        %626 = vmatprep.subr.bf16.mxu0 0
        %627 = vmatpush1.bf16.msra.mxu0 %v553
        %628 = vmatprep.subr.bf16.mxu0 0
        %629 = vmatpush1.bf16.msra.mxu0 %v554
        %630 = vmatprep.subr.bf16.mxu0 0
        %631 = vmatpush1.bf16.msra.mxu0 %v555
        %632 = vmatprep.subr.bf16.mxu0 0
        %633 = vmatpush1.bf16.msra.mxu0 %v556
        %634 = vmatprep.subr.bf16.mxu0 0
        %635 = vmatpush1.bf16.msra.mxu0 %v557
        %636 = vmatprep.subr.bf16.mxu0 0
        %637 = vmatpush1.bf16.msra.mxu0 %v558
        %638 = vmatprep.subr.bf16.mxu0 0
        %639 = vmatpush1.bf16.msra.mxu0 %v559
        %640 = vmatprep.subr.bf16.mxu0 0
        %641 = vmatpush1.bf16.msra.mxu0 0
        %642 = vmatprep.subr.bf16.mxu0 0
        %643 = vmatpush1.bf16.msra.mxu0 0
        %644 = vmatprep.subr.bf16.mxu0 0
        %645 = vmatpush1.bf16.msra.mxu0 0
        %646 = vmatprep.subr.bf16.mxu0 0
        %647 = vmatpush1.bf16.msra.mxu0 0
        %648 = vmatprep.subr.bf16.mxu0 0
        %649 = vmatpush1.bf16.msra.mxu0 0
        %650 = vmatprep.subr.bf16.mxu0 0
        %651 = vmatpush1.bf16.msra.mxu0 0
        %652 = vmatprep.subr.bf16.mxu0 0
        %653 = vmatpush1.bf16.msra.mxu0 0
        %654 = vmatprep.subr.bf16.mxu0 0
        %655 = vmatpush1.bf16.msra.mxu0 0
        %656 = vmatprep.mubr.bf16.mxu0 0
        %657 = vmatmul.mubr.bf16.gmra.mrb[0].mxu0 %v436
        %v658 = vpop.f32.mrb[0].mxu0
        %v659 = vadd.f32 %v619, %v658
        %v660 = vpop.f32.mrb[0].mxu0
        %v661 = vpop.f32.mrb[0].mxu0
        %v662 = vpop.f32.mrb[0].mxu0
        %663 = vdwg.mxu0
        %v664 = vmax.f32 %v659, 0.0
        %v665 = vpack.c.bf16 %v664, %v664
        %v666 = vld [vmem:[#allocation2] sm:$0xff]
        %v667 = vld [vmem:[%s325] sm:$0xf]
        %v668 = vld [vmem:[%s325 + $0x4] sm:$0xf]
        %v669 = vld [vmem:[%s325 + $0x8] sm:$0xf]
        %v670 = vld [vmem:[%s325 + $0xc] sm:$0xf]
        %v671 = vld [vmem:[%s325 + $0x10] sm:$0xf]
        %v672 = vld [vmem:[%s325 + $0x14] sm:$0xf]
        %v673 = vld [vmem:[%s325 + $0x18] sm:$0xf]
        %v674 = vld [vmem:[%s325 + $0x1c] sm:$0xf]
        %v675 = vld [vmem:[%s325 + $0x20] sm:$0xf]
        %v676 = vld [vmem:[%s325 + $0x24] sm:$0xf]
        %v677 = vld [vmem:[%s325 + $0x28] sm:$0xf]
        %v678 = vld [vmem:[%s325 + $0x2c] sm:$0xf]
        %v679 = vld [vmem:[%s325 + $0x30] sm:$0xf]
        %v680 = vld [vmem:[%s325 + $0x34] sm:$0xf]
        %v681 = vld [vmem:[%s325 + $0x38] sm:$0xf]
        %v682 = vld [vmem:[%s325 + $0x3c] sm:$0xf]
        %v699 = vunpack.c.l.b16 %v667
        %v700 = vunpack.c.l.b16 %v668
        %v701 = vunpack.c.l.b16 %v669
        %v702 = vunpack.c.l.b16 %v670
        %v703 = vunpack.c.l.b16 %v671
        %v704 = vunpack.c.l.b16 %v672
        %v705 = vunpack.c.l.b16 %v673
        %v706 = vunpack.c.l.b16 %v674
        %v707 = vunpack.c.l.b16 %v675
        %v708 = vunpack.c.l.b16 %v676
        %v709 = vunpack.c.l.b16 %v677
        %v710 = vunpack.c.l.b16 %v678
        %v711 = vunpack.c.l.b16 %v679
        %v712 = vunpack.c.l.b16 %v680
        %v713 = vunpack.c.l.b16 %v681
        %v714 = vunpack.c.l.b16 %v682
        %v715 = vpack.c.b16 %v700, %v699
        %v716 = vpack.c.b16 %v702, %v701
        %v717 = vpack.c.b16 %v704, %v703
        %v718 = vpack.c.b16 %v706, %v705
        %v719 = vpack.c.b16 %v708, %v707
        %v720 = vpack.c.b16 %v710, %v709
        %v721 = vpack.c.b16 %v712, %v711
        %v722 = vpack.c.b16 %v714, %v713
        %731 = vmatprep.subr.bf16.mxu0 0
        %732 = vmatpush1.bf16.msra.mxu0 %v715
        %733 = vmatprep.subr.bf16.mxu0 0
        %734 = vmatpush1.bf16.msra.mxu0 %v716
        %735 = vmatprep.subr.bf16.mxu0 0
        %736 = vmatpush1.bf16.msra.mxu0 %v717
        %737 = vmatprep.subr.bf16.mxu0 0
        %738 = vmatpush1.bf16.msra.mxu0 %v718
        %739 = vmatprep.subr.bf16.mxu0 0
        %740 = vmatpush1.bf16.msra.mxu0 %v719
        %741 = vmatprep.subr.bf16.mxu0 0
        %742 = vmatpush1.bf16.msra.mxu0 %v720
        %743 = vmatprep.subr.bf16.mxu0 0
        %744 = vmatpush1.bf16.msra.mxu0 %v721
        %745 = vmatprep.subr.bf16.mxu0 0
        %746 = vmatpush1.bf16.msra.mxu0 %v722
        %747 = vmatprep.subr.bf16.mxu0 0
        %748 = vmatpush1.bf16.msra.mxu0 0
        %749 = vmatprep.subr.bf16.mxu0 0
        %750 = vmatpush1.bf16.msra.mxu0 0
        %751 = vmatprep.subr.bf16.mxu0 0
        %752 = vmatpush1.bf16.msra.mxu0 0
        %753 = vmatprep.subr.bf16.mxu0 0
        %754 = vmatpush1.bf16.msra.mxu0 0
        %755 = vmatprep.subr.bf16.mxu0 0
        %756 = vmatpush1.bf16.msra.mxu0 0
        %757 = vmatprep.subr.bf16.mxu0 0
        %758 = vmatpush1.bf16.msra.mxu0 0
        %759 = vmatprep.subr.bf16.mxu0 0
        %760 = vmatpush1.bf16.msra.mxu0 0
        %761 = vmatprep.subr.bf16.mxu0 0
        %762 = vmatpush1.bf16.msra.mxu0 0
        %763 = vmatprep.mubr.bf16.mxu0 0
        %764 = vmatmul.mubr.bf16.gmra.mrb[0].mxu0 %v665
        %v765 = vpop.f32.mrb[0].mxu0
        %v766 = vadd.f32 0.0, %v765
        %v767 = vpop.f32.mrb[0].mxu0
        %v768 = vpop.f32.mrb[0].mxu0
        %v769 = vpop.f32.mrb[0].mxu0
        %770 = vdwg.mxu0
        %v771 = vadd.f32 %v666, %v766
        %772 = vst [vmem:[#allocation2] sm:$0xff] %v771
        %p773 = scmp.eq.s32.totalorder %s26, 2
        // Predicated region
        $region73: #{tpu_custom_call.1} parent=43 // pred_check
          %p774 = pneg %p773
        $region74: #{tpu_custom_call.1} parent=43 // pred_check_branch
          %776 = sbr.rel (%p774) target = $region76
        $region75: #{tpu_custom_call.1} parent=43 // pred_region
          %v777 = vld [vmem:[#allocation2] sm:$0xff]
          %v778 = vld [vmem:[#allocation11] sm:$0x1]
          %v779 = vunpack.c.l.bf16 %v778
          %v780 = vlaneseq
          %v781 = vshrl.u32 %v780, 7
          %v782 = vsub.s32 0, %v781
          %v783 = vrot.slane %v779, %v782
          %v784 = vadd.f32 %v777, %v783
          %v785 = vld [vmem:[#allocation12] sm:$0xf]
          %v786 = vunpack.c.l.bf16 %v785
          %v787 = vsub.f32 %v784, %v786
          %v788 = vlaneseq
          %v789 = vshrl.u32 %v788, 7
          %vm790 = vcmp.lt.s32.totalorder %v789, 2
          %v791 = vsel %vm790, %v787, 0.0
          %v792 = vmul.f32 %v791, %v791
          %793 = vadd.xlane.f32.xlu0 %v792
          %v794 = vpop.xlane.xlu0 %793
          %v795 = vrot.slane %v794, 4
          %v796 = vadd.f32 %v794, %v795
          %v797 = vrot.slane %v796, 2
          %v798 = vadd.f32 %v796, %v797
          %v799 = vrot.slane %v798, 1
          %v800 = vadd.f32 %v798, %v799
          %s801 = vtos %v800
          %s802 = smul.f32 %s801, 0.00390625
          %s803 = scalar_lea.smem [#allocation14], 0
          %804 = sst [smem:[%s803]] %s802
        $region76: #{tpu_custom_call.1} parent=43 // pred_fallthru
          _
        // Predicated region
        $region77: #{tpu_custom_call.1} parent=43 // pred_check
          %p805 = pneg %p180
        $region78: #{tpu_custom_call.1} parent=43 // pred_check_branch
          %807 = sbr.rel (%p805) target = $region80
        $region79: #{tpu_custom_call.1} parent=43 // pred_region
          %s809 = ssub.s32 16, 16
          %810 = vsyncadd [#allocation5], %s809
          %813 = dma.smem_to_hbm [#allocation14], 16, %s6, [#allocation5]
        $region80: #{tpu_custom_call.1} parent=43 // pred_fallthru
          _
        // Predicated region
        $region81: #{tpu_custom_call.1} parent=43 // pred_check
          %p814 = pneg %p180
        $region82: #{tpu_custom_call.1} parent=43 // pred_check_branch
          %816 = sbr.rel (%p814) target = $region84
        $region83: #{tpu_custom_call.1} parent=43 // pred_region
          %817 = dma.done [#allocation5], 16
        $region84: #{tpu_custom_call.1} parent=43 // pred_fallthru
          _
        %818 = sfence
      $region44: #{tpu_custom_call.1} parent=5 // pred_fallthru
        _
      %p819 = scmp.le.s32.totalorder 2, %s21
      // Predicated region
      $region85: #{tpu_custom_call.1} parent=5 // pred_check
        %p820 = pneg %p819
      $region86: #{tpu_custom_call.1} parent=5 // pred_check_branch
        %822 = sbr.rel (%p820) target = $region88
      $region87: #{tpu_custom_call.1} parent=5 // pred_region
        %s823 = ssub.s32 %s21, 2
      $region88: #{tpu_custom_call.1} parent=5 // pred_fallthru
        _
    $region6: #{tpu_custom_call.1} parent=1 // loop_footer
      %s25 = sadd.s32 1, %s21
    $region7: #{tpu_custom_call.1} parent=1 // loop_footer_branch
      %20 = sbr.rel target = $region3
    $region8: #{tpu_custom_call.1} parent=1 // loop_exit
      _
    %824 = vsyncpa [#allocation4], 1
    %s825 = scalar_lea.sflag [#allocation4], 1
    %826 = vsyncpa %s825, 1
    %827 = vsyncpa [#allocation7], 1
    %s828 = scalar_lea.sflag [#allocation7], 1
    %829 = vsyncpa %s828, 1
    %830 = vsyncpa [#allocation10], 1
    %s831 = scalar_lea.sflag [#allocation10], 1
    %832 = vsyncpa %s831, 1
    %833 = vsyncpa [#allocation13], 1
    %834 = vsyncpa [#allocation5], 1
    %s835 = scalar_lea.sflag [#allocation5], 1
    %836 = vsyncpa %s835, 1

</llo_original>
